<compile_context>
chip_gen: v6e
topology: v6e:2x2x1
jax: 0.10.0
libtpu: 0.0.40
codegen_flags: <defaults>
</compile_context>

<pallas_src>
import jax
import jax.numpy as jnp
from jax.experimental import pallas as pl
from jax.experimental.pallas import tpu as pltpu

EPS = 1e-5          # GraphNorm eps
NEG_SLOPE = 0.1     # LeakyReLU negative slope


# --------------------------------------------------------------------------- #
# Kernels
# --------------------------------------------------------------------------- #
def graph_norm_kernel(x_ref, ms_ref, mt_ref, gamma_ref, beta_ref, mscale_ref,
                      xn_ref):
    """GraphNorm over all nodes at once (whole arrays resident in VMEM)."""
    x = x_ref[...]                                                    # [N, Cp] f32
    mean_g = jnp.dot(ms_ref[...], x, preferred_element_type=jnp.float32)     # [G, Cp]
    mean_n = jnp.dot(mt_ref[...], mean_g, preferred_element_type=jnp.float32)
    centered = x - mean_n * mscale_ref[...]
    var_g = jnp.dot(ms_ref[...], centered * centered,
                    preferred_element_type=jnp.float32)
    scale_g = jax.lax.rsqrt(var_g + EPS) * gamma_ref[...]             # gamma folded
    scale_n = jnp.dot(mt_ref[...], scale_g, preferred_element_type=jnp.float32)
    xn_ref[...] = (centered * scale_n + beta_ref[...]).astype(xn_ref.dtype)


def fused_convs_kernel(x_ref, a_ref, xn_ref, w1r_ref, w1s_ref, b1_ref,
                       w2r_ref, w2s_ref, b2_ref, out_ref):
    """Small-graph fast path: both GraphConvs with A fully VMEM-resident."""
    a = a_ref[...]                                                    # [N, N]  bf16
    xn = xn_ref[...]                                                  # [N, Cp] bf16
    agg1 = jnp.dot(a, xn, preferred_element_type=jnp.float32)
    h = (jnp.dot(agg1.astype(jnp.bfloat16), w1r_ref[...],
                 preferred_element_type=jnp.float32)
         + jnp.dot(xn, w1s_ref[...], preferred_element_type=jnp.float32)
         + b1_ref[...])
    h = jnp.where(h > 0, h, NEG_SLOPE * h).astype(jnp.bfloat16)       # LeakyReLU(0.1)
    agg2 = jnp.dot(a, h, preferred_element_type=jnp.float32)
    y = (jnp.dot(agg2.astype(jnp.bfloat16), w2r_ref[...],
                 preferred_element_type=jnp.float32)
         + jnp.dot(h, w2s_ref[...], preferred_element_type=jnp.float32)
         + b2_ref[...])
    out_ref[...] = x_ref[...] + y                                     # residual


def conv1_kernel(a_ref, xn_ref, wr_ref, ws_ref, b_ref, h_ref):
    """GraphConv1 + LeakyReLU on one destination-row tile (streaming path)."""
    i = pl.program_id(0)
    tile_n = h_ref.shape[0]
    row0 = pl.multiple_of(i * tile_n, tile_n)
    agg = jnp.dot(a_ref[...], xn_ref[...], preferred_element_type=jnp.float32)
    feat = xn_ref[pl.ds(row0, tile_n), :]
    h = (jnp.dot(agg.astype(jnp.bfloat16), wr_ref[...],
                 preferred_element_type=jnp.float32)
         + jnp.dot(feat, ws_ref[...], preferred_element_type=jnp.float32)
         + b_ref[...])
    h = jnp.where(h > 0, h, NEG_SLOPE * h)
    h_ref[...] = h.astype(h_ref.dtype)


def conv2_kernel(a_ref, h_ref, x_ref, wr_ref, ws_ref, b_ref, out_ref):
    """GraphConv2 + residual on one destination-row tile (streaming path)."""
    i = pl.program_id(0)
    tile_n = out_ref.shape[0]
    row0 = pl.multiple_of(i * tile_n, tile_n)
    agg = jnp.dot(a_ref[...], h_ref[...], preferred_element_type=jnp.float32)
    feat = h_ref[pl.ds(row0, tile_n), :]
    y = (jnp.dot(agg.astype(jnp.bfloat16), wr_ref[...],
                 preferred_element_type=jnp.float32)
         + jnp.dot(feat, ws_ref[...], preferred_element_type=jnp.float32)
         + b_ref[...])
    out_ref[...] = x_ref[...] + y


# --------------------------------------------------------------------------- #
# Wrapper / glue
# --------------------------------------------------------------------------- #
def _round_up(v, m):
    return ((v + m - 1) // m) * m


def _vmem_capacity_bytes():
    try:
        cap = int(pltpu.get_tpu_info().vmem_capacity_bytes)
        if cap > 0:
            return cap
    except Exception:
        pass
    return 64 * 1024 * 1024            # conservative fallback (v7x per-core VMEM)


def _single_buffered(shape):
    """Constant-index input, single-buffered to save VMEM (Buffered(1))."""
    kwargs = {}
    if hasattr(pl, "Buffered"):
        kwargs["pipeline_mode"] = pl.Buffered(1)
    return pl.BlockSpec(shape, lambda i: (0, 0), **kwargs)


def graph_block(x, edge_index, edge_weight, batch_map, num_graphs, params,
                *, tile_n=None, force_stream=False):
    """Pallas GraphBlock forward. x:[N,C] f32, edge_index:[2,E] int, edge_weight:[E]."""
    N, C = x.shape
    x = x.astype(jnp.float32)
    Cp = _round_up(max(C, 128), 128)          # lane-dense feature width

    cap = _vmem_capacity_bytes()
    vmem_limit = max(int(cap * 0.75), 32 * 1024 * 1024)   # ~96 MiB v5e/v6e, ~48 MiB v7x

    # ---- row-tile size (streaming path): biggest A row block that fits VMEM ---
    if tile_n is None:
        n_est = _round_up(N, 16)
        resident = n_est * Cp * 2 + 2 * Cp * Cp * 2            # xn/h + two weights
        per_row = n_est * 2 * 2 + Cp * (4 + 4 + 2) * 2         # A dbl-buf + row blocks
        tile_n = (int(cap * 0.5) - resident) // max(per_row, 1)
        tile_n = max(256, min(tile_n, 2048))
    tile_n = _round_up(min(tile_n, _round_up(N, 16)), 16)
    N_pad = _round_up(N, tile_n)
    num_tiles = N_pad // tile_n
    pad_nodes = N_pad - N

    # ---- densify graph structure (glue, plain JAX) -----------------------------
    ew = edge_weight.astype(jnp.float32)
    A = jnp.zeros((N_pad, N_pad), jnp.float32).at[edge_index[1], edge_index[0]].add(ew)
    A = A.astype(jnp.bfloat16)                # bf16 halves the dominant HBM stream
    # TODO(synk): block-diagonal-A skip — sort nodes by graph, prefetch per-tile
    # column ranges (PrefetchScalarGridSpec / pl.BoundedSlice) so all-zero
    # cross-graph blocks are never DMA'd (~G x fewer A bytes for many graphs).
    # TODO(synk): on v7x carry A in fp8 (e4m3) to halve the A stream again.

    batch_p = batch_map.astype(jnp.int32)
    if pad_nodes:
        # padded nodes live in a dedicated dummy graph so real stats are untouched
        batch_p = jnp.concatenate(
            [batch_p, jnp.full((pad_nodes,), num_graphs, jnp.int32)])
    Gp = _round_up(max(num_graphs + (1 if pad_nodes else 0), 1), 8)
    M = (batch_p[None, :] == jnp.arange(Gp, dtype=jnp.int32)[:, None]).astype(jnp.float32)
    cnt = M.sum(axis=1, keepdims=True)
    Ms = M * jnp.where(cnt > 0, 1.0 / cnt, 0.0)   # 1/count folded in (scatter-mean)
    Mt = M.T                                      # pre-transposed in glue

    gamma, beta, mscale, w1_rel, b1, w1_root, w2_rel, b2, w2_root = params

    def pad_vec(v):
        return jnp.pad(v.astype(jnp.float32).reshape(1, C), ((0, 0), (0, Cp - C)))

    def pad_w_t(w):       # torch Linear weight [out,in] -> padded transpose, bf16
        wt = jnp.zeros((Cp, Cp), jnp.float32).at[:C, :C].set(w.T.astype(jnp.float32))
        return wt.astype(jnp.bfloat16)

    x_p = jnp.pad(x, ((0, pad_nodes), (0, Cp - C)))
    gamma_p, beta_p, mscale_p = pad_vec(gamma), pad_vec(beta), pad_vec(mscale)
    w1r, w1s, b1_p = pad_w_t(w1_rel), pad_w_t(w1_root), pad_vec(b1)
    w2r, w2s, b2_p = pad_w_t(w2_rel), pad_w_t(w2_root), pad_vec(b2)

    # ---- 1) GraphNorm: tiny single-shot call, x -> xn (bf16) -------------------
    xn = pl.pallas_call(
        graph_norm_kernel,
        out_shape=jax.ShapeDtypeStruct((N_pad, Cp), jnp.bfloat16),
        compiler_params=pltpu.CompilerParams(vmem_limit_bytes=vmem_limit),
    )(x_p, Ms, Mt, gamma_p, beta_p, mscale_p)

    # ---- 2) the two GraphConvs --------------------------------------------------
    # Small-graph fast path: A fully VMEM-resident -> the dominant A stream is
    # read from HBM exactly once.
    fused_bytes = (N_pad * N_pad * 2                 # A bf16
                   + N_pad * Cp * 20                 # x/out f32, xn/h bf16, f32 temps
                   + 4 * Cp * Cp * 2)                # weights
    use_fused = (not force_stream) and fused_bytes <= int(cap * 0.35)

    if use_fused:
        out = pl.pallas_call(
            fused_convs_kernel,
            out_shape=jax.ShapeDtypeStruct((N_pad, Cp), jnp.float32),
            compiler_params=pltpu.CompilerParams(vmem_limit_bytes=vmem_limit),
        )(x_p, A, xn, w1r, w1s, b1_p, w2r, w2s, b2_p)
        return out[:N, :C]

    # Streaming path: two row-tiled calls; h round-trips HBM (negligible vs A),
    # so the row-tile axis is independent -> "parallel" (megacore-safe on v7x).
    a_row_spec = pl.BlockSpec((tile_n, N_pad), lambda i: (i, 0))
    row_spec = pl.BlockSpec((tile_n, Cp), lambda i: (i, 0))

    h = pl.pallas_call(
        conv1_kernel,
        out_shape=jax.ShapeDtypeStruct((N_pad, Cp), jnp.bfloat16),
        grid=(num_tiles,),
        in_specs=[a_row_spec,
                  _single_buffered((N_pad, Cp)),     # xn (resident)
                  _single_buffered((Cp, Cp)),        # w1_rel.T
                  _single_buffered((Cp, Cp)),        # w1_root.T
                  _single_buffered((1, Cp))],        # b1
        out_specs=row_spec,
        compiler_params=pltpu.CompilerParams(
            dimension_semantics=("parallel",),
            vmem_limit_bytes=vmem_limit),
    )(A, xn, w1r, w1s, b1_p)

    out = pl.pallas_call(
        conv2_kernel,
        out_shape=jax.ShapeDtypeStruct((N_pad, Cp), jnp.float32),
        grid=(num_tiles,),
        in_specs=[a_row_spec,
                  _single_buffered((N_pad, Cp)),     # h (resident)
                  row_spec,                          # x (residual, streamed rows)
                  _single_buffered((Cp, Cp)),        # w2_rel.T
                  _single_buffered((Cp, Cp)),        # w2_root.T
                  _single_buffered((1, Cp))],        # b2
        out_specs=row_spec,
        compiler_params=pltpu.CompilerParams(
            dimension_semantics=("parallel",),
            vmem_limit_bytes=vmem_limit),
    )(A, h, x_p, w2r, w2s, b2_p)
    return out[:N, :C]


# --------------------------------------------------------------------------- #
# Pure-JAX reference (torch_geometric semantics)
# --------------------------------------------------------------------------- #
def reference(x, edge_index, edge_weight, batch_map, num_graphs, params):
    gamma, beta, mscale, w1_rel, b1, w1_root, w2_rel, b2, w2_root = params
    N, C = x.shape
    cnt = jax.ops.segment_sum(jnp.ones((N,), jnp.float32), batch_map,
                              num_graphs)[:, None]
    mean = jax.ops.segment_sum(x, batch_map, num_graphs) / cnt
    out = x - mean[batch_map] * mscale
    var = jax.ops.segment_sum(out * out, batch_map, num_graphs) / cnt
    std = jnp.sqrt(var + EPS)[batch_map]
    xn = gamma * out / std + beta

    def conv(feat, w_rel, b, w_root):
        msg = feat[edge_index[0]] * edge_weight[:, None]
        agg = jax.ops.segment_sum(msg, edge_index[1], N)
        return agg @ w_rel.T + b + feat @ w_root.T

    h = conv(xn, w1_rel, b1, w1_root)
    h = jnp.where(h > 0, h, NEG_SLOPE * h)
    y = conv(h, w2_rel, b2, w2_root)
    return x + y


if __name__ == "__main__":
    key = jax.random.PRNGKey(0)
    N, C, E, G = 256, 32, 512, 4   # nodes, width, edges, graphs
    ks = jax.random.split(key, 10)

    x = jax.random.normal(ks[0], (N, C), jnp.float32)
    src = jax.random.randint(ks[1], (E,), 0, N, dtype=jnp.int32)
    dst = jax.random.randint(ks[2], (E,), 0, N, dtype=jnp.int32)
    edge_index = jnp.stack([src, dst])                       # [2, E]
    edge_weight = jax.random.uniform(ks[3], (E,), jnp.float32)
    batch_map = (jnp.arange(N) * G // N).astype(jnp.int32)   # 4 graphs of 64 nodes

    # Deterministic parameters (shapes from GraphBlock.__init__ with width=C).
    # GraphNorm defaults: weight=1, bias=0, mean_scale=1.
    gamma = jnp.ones((C,), jnp.float32)
    beta = jnp.zeros((C,), jnp.float32)
    mscale = jnp.ones((C,), jnp.float32)

    def lin_init(k, shape, fan_in):
        bound = 1.0 / (fan_in ** 0.5)
        return jax.random.uniform(k, shape, jnp.float32, -bound, bound)

    w1_rel = lin_init(ks[4], (C, C), C)   # GraphConv1.lin_rel (with bias)
    b1 = lin_init(ks[5], (C,), C)
    w1_root = lin_init(ks[6], (C, C), C)  # GraphConv1.lin_root (no bias)
    w2_rel = lin_init(ks[7], (C, C), C)
    b2 = lin_init(ks[8], (C,), C)
    w2_root = lin_init(ks[9], (C, C), C)
    params = (gamma, beta, mscale, w1_rel, b1, w1_root, w2_rel, b2, w2_root)

    ref = reference(x, edge_index, edge_weight, batch_map, G, params)
    scale = float(jnp.max(jnp.abs(ref)))

    # 1) small-graph fast path (A fully VMEM-resident, read once)
    out_fast = jax.block_until_ready(
        graph_block(x, edge_index, edge_weight, batch_map, G, params))
    # 2) streaming path (A row blocks, "parallel" row axis, Buffered(1) residents)
    out_stream = jax.block_until_ready(
        graph_block(x, edge_index, edge_weight, batch_map, G, params,
                    tile_n=128, force_stream=True))

    for out in (out_fast, out_stream):
        assert out.shape == (N, C)
        # Tolerance loosened vs pure-f32: A / xn / h feed the MXU as bf16.
        err = float(jnp.max(jnp.abs(out - ref)))
        assert err <= 0.05 * scale + 0.05, \
            f"mismatch: max|err|={err:.4f} scale={scale:.4f}"
    print("KERNEL_OK")
</pallas_src>

<mosaic_0001>
module attributes {stable_mosaic.version = 11 : i64} {
  func.func @graph_norm_kernel(%arg0: memref<256x128xf32, #tpu.memory_space<vmem>>, %arg1: memref<8x256xf32, #tpu.memory_space<vmem>>, %arg2: memref<256x8xf32, #tpu.memory_space<vmem>>, %arg3: memref<1x128xf32, #tpu.memory_space<vmem>>, %arg4: memref<1x128xf32, #tpu.memory_space<vmem>>, %arg5: memref<1x128xf32, #tpu.memory_space<vmem>>, %arg6: memref<256x128xbf16, #tpu.memory_space<vmem>>) attributes {dimension_semantics = [], scalar_prefetch = 0 : i64, scratch_operands = 0 : i64, tpu.core_type = #tpu.core_type<tc>} {
    %c0 = arith.constant 0 : index
    %c0_0 = arith.constant 0 : index
    %0 = vector.load %arg0[%c0, %c0_0] : memref<256x128xf32, #tpu.memory_space<vmem>>, vector<256x128xf32>
    %c0_1 = arith.constant 0 : index
    %c0_2 = arith.constant 0 : index
    %1 = vector.load %arg1[%c0_1, %c0_2] : memref<8x256xf32, #tpu.memory_space<vmem>>, vector<8x256xf32>
    %cst = arith.constant dense<0.000000e+00> : vector<8x128xf32>
    %2 = tpu.matmul %1, %0, %cst {dimension_numbers = #tpu.dot_dimension_numbers<[1], [0], [0], [1], [0, 0, 1, 1], [], []>} : vector<8x256xf32>, vector<256x128xf32>, vector<8x128xf32> -> vector<8x128xf32>
    %c0_3 = arith.constant 0 : index
    %c0_4 = arith.constant 0 : index
    %3 = vector.load %arg2[%c0_3, %c0_4] : memref<256x8xf32, #tpu.memory_space<vmem>>, vector<256x8xf32>
    %cst_5 = arith.constant dense<0.000000e+00> : vector<256x128xf32>
    %4 = tpu.matmul %3, %2, %cst_5 {dimension_numbers = #tpu.dot_dimension_numbers<[1], [0], [0], [1], [0, 0, 1, 1], [], []>} : vector<256x8xf32>, vector<8x128xf32>, vector<256x128xf32> -> vector<256x128xf32>
    %c0_6 = arith.constant 0 : index
    %c0_7 = arith.constant 0 : index
    %5 = vector.load %arg5[%c0_6, %c0_7] : memref<1x128xf32, #tpu.memory_space<vmem>>, vector<1x128xf32>
    %6 = vector.broadcast %5 : vector<1x128xf32> to vector<256x128xf32>
    %7 = arith.mulf %4, %6 : vector<256x128xf32>
    %8 = arith.subf %0, %7 : vector<256x128xf32>
    %c0_8 = arith.constant 0 : index
    %c0_9 = arith.constant 0 : index
    %9 = vector.load %arg1[%c0_8, %c0_9] : memref<8x256xf32, #tpu.memory_space<vmem>>, vector<8x256xf32>
    %10 = arith.mulf %8, %8 : vector<256x128xf32>
    %cst_10 = arith.constant dense<0.000000e+00> : vector<8x128xf32>
    %11 = tpu.matmul %9, %10, %cst_10 {dimension_numbers = #tpu.dot_dimension_numbers<[1], [0], [0], [1], [0, 0, 1, 1], [], []>} : vector<8x256xf32>, vector<256x128xf32>, vector<8x128xf32> -> vector<8x128xf32>
    %cst_11 = arith.constant 9.99999974E-6 : f32
    %12 = vector.broadcast %cst_11 : f32 to vector<8x128xf32>
    %13 = arith.addf %11, %12 : vector<8x128xf32>
    %14 = math.rsqrt %13 : vector<8x128xf32>
    %c0_12 = arith.constant 0 : index
    %c0_13 = arith.constant 0 : index
    %15 = vector.load %arg3[%c0_12, %c0_13] : memref<1x128xf32, #tpu.memory_space<vmem>>, vector<1x128xf32>
    %16 = vector.broadcast %15 : vector<1x128xf32> to vector<8x128xf32>
    %17 = arith.mulf %14, %16 : vector<8x128xf32>
    %c0_14 = arith.constant 0 : index
    %c0_15 = arith.constant 0 : index
    %18 = vector.load %arg2[%c0_14, %c0_15] : memref<256x8xf32, #tpu.memory_space<vmem>>, vector<256x8xf32>
    %cst_16 = arith.constant dense<0.000000e+00> : vector<256x128xf32>
    %19 = tpu.matmul %18, %17, %cst_16 {dimension_numbers = #tpu.dot_dimension_numbers<[1], [0], [0], [1], [0, 0, 1, 1], [], []>} : vector<256x8xf32>, vector<8x128xf32>, vector<256x128xf32> -> vector<256x128xf32>
    %20 = arith.mulf %8, %19 : vector<256x128xf32>
    %c0_17 = arith.constant 0 : index
    %c0_18 = arith.constant 0 : index
    %21 = vector.load %arg4[%c0_17, %c0_18] : memref<1x128xf32, #tpu.memory_space<vmem>>, vector<1x128xf32>
    %22 = vector.broadcast %21 : vector<1x128xf32> to vector<256x128xf32>
    %23 = arith.addf %20, %22 : vector<256x128xf32>
    %24 = arith.truncf %23 : vector<256x128xf32> to vector<256x128xbf16>
    %c0_19 = arith.constant 0 : index
    %c0_20 = arith.constant 0 : index
    %25 = vector.load %arg6[%c0_19, %c0_20] : memref<256x128xbf16, #tpu.memory_space<vmem>>, vector<256x128xbf16>
    tpu.vector_store %arg6[%c0_19, %c0_20], %24 {strides = array<i32>} : memref<256x128xbf16, #tpu.memory_space<vmem>>, vector<256x128xbf16>,
    return
  }
}

</mosaic_0001>

<llo_original>
// kernel: tpu_custom_call.1
$region0: #{tpu_custom_call.1}
  #allocation0 [shape = 'u32[]', space=smem, size = 0x4, offset = 0x4, fixed_abs, tag = 'smem constant byte address 0x4 - core index']
  #allocation1 [shape = 'u32[144,128]{1,0:T(1,128)}', space=vmem, size = 0x12000, scoped, tag = 'internal scratch']
  %s0 = inlined_call_operand.vmem [shape: f32[256,128], index: 0, kind: input, shape index: {}]
  %s1 = inlined_call_operand.vmem [shape: f32[8,256], index: 1, kind: input, shape index: {}]
  %s2 = inlined_call_operand.vmem [shape: f32[256,8], index: 2, kind: input, shape index: {}]
  %s3 = inlined_call_operand.vmem [shape: f32[1,128], index: 3, kind: input, shape index: {}]
  %s4 = inlined_call_operand.vmem [shape: f32[1,128], index: 4, kind: input, shape index: {}]
  %s5 = inlined_call_operand.vmem [shape: f32[1,128], index: 5, kind: input, shape index: {}]
  %s6 = inlined_call_operand.hbm [shape: bf16[256,128], index: 6, kind: output, shape index: {}]
  %s7 = sld [smem:[#allocation0]]
  $region34: #{tpu_custom_call.1} parent=0
    _
  %s9 = ssub.s32 1, %s7
  %s10 = scalar_select 0, %s9, %s7
  $region1: #{tpu_custom_call.1} parent=0
    #allocation2 [shape = 'u8[65536]{0}', space=vmem, size = 0x10000, scoped, tag = 'output window, operand 0, single buffered']
    #allocation3 [shape = 's32[1]{0}', space=sflag, size = 0x4, scoped, tag = 'scoped memory for tpu_custom_call.1']
    %11 = vsyncpa [#allocation3], 0
    // Predicated region
    $region2: #{tpu_custom_call.1} parent=1 // pred_check
      _
    $region3: #{tpu_custom_call.1} parent=1 // pred_check_branch
      %13 = sbr.rel (0) target = $region5
    $region4: #{tpu_custom_call.1} parent=1 // pred_region
      _
    $region5: #{tpu_custom_call.1} parent=1 // pred_fallthru
      _
    // Predicated region
    $region6: #{tpu_custom_call.1} parent=1 // pred_check
      _
    $region7: #{tpu_custom_call.1} parent=1 // pred_check_branch
      %15 = sbr.rel (0) target = $region9
    $region8: #{tpu_custom_call.1} parent=1 // pred_region
      _
    $region9: #{tpu_custom_call.1} parent=1 // pred_fallthru
      _
    // Predicated region
    $region10: #{tpu_custom_call.1} parent=1 // pred_check
      _
    $region11: #{tpu_custom_call.1} parent=1 // pred_check_branch
      %17 = sbr.rel (0) target = $region13
    $region12: #{tpu_custom_call.1} parent=1 // pred_region
      _
    $region13: #{tpu_custom_call.1} parent=1 // pred_fallthru
      _
    // Predicated region
    $region14: #{tpu_custom_call.1} parent=1 // pred_check
      _
    $region15: #{tpu_custom_call.1} parent=1 // pred_check_branch
      %19 = sbr.rel (0) target = $region17
    $region16: #{tpu_custom_call.1} parent=1 // pred_region
      _
    $region17: #{tpu_custom_call.1} parent=1 // pred_fallthru
      _
    // Predicated region
    $region18: #{tpu_custom_call.1} parent=1 // pred_check
      _
    $region19: #{tpu_custom_call.1} parent=1 // pred_check_branch
      %21 = sbr.rel (0) target = $region21
    $region20: #{tpu_custom_call.1} parent=1 // pred_region
      _
    $region21: #{tpu_custom_call.1} parent=1 // pred_fallthru
      _
    // Predicated region
    $region22: #{tpu_custom_call.1} parent=1 // pred_check
      _
    $region23: #{tpu_custom_call.1} parent=1 // pred_check_branch
      %23 = sbr.rel (0) target = $region25
    $region24: #{tpu_custom_call.1} parent=1 // pred_region
      _
    $region25: #{tpu_custom_call.1} parent=1 // pred_fallthru
      _
    %v24 = vld [vmem:[%s0] sm:$0xff]
    %v25 = vld [vmem:[%s0 + $0x8] sm:$0xff]
    %v26 = vld [vmem:[%s0 + $0x10] sm:$0xff]
    %v27 = vld [vmem:[%s0 + $0x18] sm:$0xff]
    %v28 = vld [vmem:[%s0 + $0x20] sm:$0xff]
    %v29 = vld [vmem:[%s0 + $0x28] sm:$0xff]
    %v30 = vld [vmem:[%s0 + $0x30] sm:$0xff]
    %v31 = vld [vmem:[%s0 + $0x38] sm:$0xff]
    %v32 = vld [vmem:[%s0 + $0x40] sm:$0xff]
    %v33 = vld [vmem:[%s0 + $0x48] sm:$0xff]
    %v34 = vld [vmem:[%s0 + $0x50] sm:$0xff]
    %v35 = vld [vmem:[%s0 + $0x58] sm:$0xff]
    %v36 = vld [vmem:[%s0 + $0x60] sm:$0xff]
    %v37 = vld [vmem:[%s0 + $0x68] sm:$0xff]
    %v38 = vld [vmem:[%s0 + $0x70] sm:$0xff]
    %v39 = vld [vmem:[%s0 + $0x78] sm:$0xff]
    %v40 = vld [vmem:[%s0 + $0x80] sm:$0xff]
    %v41 = vld [vmem:[%s0 + $0x88] sm:$0xff]
    %v42 = vld [vmem:[%s0 + $0x90] sm:$0xff]
    %v43 = vld [vmem:[%s0 + $0x98] sm:$0xff]
    %v44 = vld [vmem:[%s0 + $0xa0] sm:$0xff]
    %v45 = vld [vmem:[%s0 + $0xa8] sm:$0xff]
    %v46 = vld [vmem:[%s0 + $0xb0] sm:$0xff]
    %v47 = vld [vmem:[%s0 + $0xb8] sm:$0xff]
    %v48 = vld [vmem:[%s0 + $0xc0] sm:$0xff]
    %v49 = vld [vmem:[%s0 + $0xc8] sm:$0xff]
    %v50 = vld [vmem:[%s0 + $0xd0] sm:$0xff]
    %v51 = vld [vmem:[%s0 + $0xd8] sm:$0xff]
    %v52 = vld [vmem:[%s0 + $0xe0] sm:$0xff]
    %v53 = vld [vmem:[%s0 + $0xe8] sm:$0xff]
    %v54 = vld [vmem:[%s0 + $0xf0] sm:$0xff]
    %v55 = vld [vmem:[%s0 + $0xf8] sm:$0xff]
    %v56 = vld [vmem:[%s1] sm:$0xff]
    %v57 = vld [vmem:[%s1 + $0x8] sm:$0xff]
    %58 = vmatprep.subr.mxu0 0.0
    %59 = vmatpush1.msra.mxu0 %v39
    %60 = vmatprep.subr.mxu0 0.0
    %61 = vmatpush1.msra.mxu0 %v38
    %62 = vmatprep.subr.mxu0 0.0
    %63 = vmatpush1.msra.mxu0 %v37
    %64 = vmatprep.subr.mxu0 0.0
    %65 = vmatpush1.msra.mxu0 %v36
    %66 = vmatprep.subr.mxu0 0.0
    %67 = vmatpush1.msra.mxu0 %v35
    %68 = vmatprep.subr.mxu0 0.0
    %69 = vmatpush1.msra.mxu0 %v34
    %70 = vmatprep.subr.mxu0 0.0
    %71 = vmatpush1.msra.mxu0 %v33
    %72 = vmatprep.subr.mxu0 0.0
    %73 = vmatpush1.msra.mxu0 %v32
    %74 = vmatprep.subr.mxu0 0.0
    %75 = vmatpush1.msra.mxu0 %v31
    %76 = vmatprep.subr.mxu0 0.0
    %77 = vmatpush1.msra.mxu0 %v30
    %78 = vmatprep.subr.mxu0 0.0
    %79 = vmatpush1.msra.mxu0 %v29
    %80 = vmatprep.subr.mxu0 0.0
    %81 = vmatpush1.msra.mxu0 %v28
    %82 = vmatprep.subr.mxu0 0.0
    %83 = vmatpush1.msra.mxu0 %v27
    %84 = vmatprep.subr.mxu0 0.0
    %85 = vmatpush1.msra.mxu0 %v26
    %86 = vmatprep.subr.mxu0 0.0
    %87 = vmatpush1.msra.mxu0 %v25
    %88 = vmatprep.subr.mxu0 0.0
    %89 = vmatpush1.msra.mxu0 %v24
    %90 = vmatprep.subr.mxu0 0.0
    %91 = vmatpush2.msra.mxu0 %v55
    %92 = vmatprep.subr.mxu0 0.0
    %93 = vmatpush2.msra.mxu0 %v54
    %94 = vmatprep.subr.mxu0 0.0
    %95 = vmatpush2.msra.mxu0 %v53
    %96 = vmatprep.subr.mxu0 0.0
    %97 = vmatpush2.msra.mxu0 %v52
    %98 = vmatprep.subr.mxu0 0.0
    %99 = vmatpush2.msra.mxu0 %v51
    %100 = vmatprep.subr.mxu0 0.0
    %101 = vmatpush2.msra.mxu0 %v50
    %102 = vmatprep.subr.mxu0 0.0
    %103 = vmatpush2.msra.mxu0 %v49
    %104 = vmatprep.subr.mxu0 0.0
    %105 = vmatpush2.msra.mxu0 %v48
    %106 = vmatprep.subr.mxu0 0.0
    %107 = vmatpush2.msra.mxu0 %v47
    %108 = vmatprep.subr.mxu0 0.0
    %109 = vmatpush2.msra.mxu0 %v46
    %110 = vmatprep.subr.mxu0 0.0
    %111 = vmatpush2.msra.mxu0 %v45
    %112 = vmatprep.subr.mxu0 0.0
    %113 = vmatpush2.msra.mxu0 %v44
    %114 = vmatprep.subr.mxu0 0.0
    %115 = vmatpush2.msra.mxu0 %v43
    %116 = vmatprep.subr.mxu0 0.0
    %117 = vmatpush2.msra.mxu0 %v42
    %118 = vmatprep.subr.mxu0 0.0
    %119 = vmatpush2.msra.mxu0 %v41
    %120 = vmatprep.subr.mxu0 0.0
    %121 = vmatpush2.msra.mxu0 %v40
    %122 = vmatprep.mubr.f32.mxu0 %v57
    %123 = vmatmul.mubr.f32.gmra.mxu0 %v56
    %v124 = vpop.f32.mrf.mxu0
    %v125 = vadd.f32 0.0, %v124
    %v126 = vpop.f32.mrf.mxu0
    %127 = vdwg.mxu0
    %v128 = vld [vmem:[%s2] sm:$0xff]
    %v129 = vld [vmem:[%s2 + $0x8] sm:$0xff]
    %v130 = vld [vmem:[%s2 + $0x10] sm:$0xff]
    %v131 = vld [vmem:[%s2 + $0x18] sm:$0xff]
    %v132 = vld [vmem:[%s2 + $0x20] sm:$0xff]
    %v133 = vld [vmem:[%s2 + $0x28] sm:$0xff]
    %v134 = vld [vmem:[%s2 + $0x30] sm:$0xff]
    %v135 = vld [vmem:[%s2 + $0x38] sm:$0xff]
    %v136 = vld [vmem:[%s2 + $0x40] sm:$0xff]
    %v137 = vld [vmem:[%s2 + $0x48] sm:$0xff]
    %v138 = vld [vmem:[%s2 + $0x50] sm:$0xff]
    %v139 = vld [vmem:[%s2 + $0x58] sm:$0xff]
    %v140 = vld [vmem:[%s2 + $0x60] sm:$0xff]
    %v141 = vld [vmem:[%s2 + $0x68] sm:$0xff]
    %v142 = vld [vmem:[%s2 + $0x70] sm:$0xff]
    %v143 = vld [vmem:[%s2 + $0x78] sm:$0xff]
    %v144 = vld [vmem:[%s2 + $0x80] sm:$0xff]
    %v145 = vld [vmem:[%s2 + $0x88] sm:$0xff]
    %v146 = vld [vmem:[%s2 + $0x90] sm:$0xff]
    %v147 = vld [vmem:[%s2 + $0x98] sm:$0xff]
    %v148 = vld [vmem:[%s2 + $0xa0] sm:$0xff]
    %v149 = vld [vmem:[%s2 + $0xa8] sm:$0xff]
    %v150 = vld [vmem:[%s2 + $0xb0] sm:$0xff]
    %v151 = vld [vmem:[%s2 + $0xb8] sm:$0xff]
    %v152 = vld [vmem:[%s2 + $0xc0] sm:$0xff]
    %v153 = vld [vmem:[%s2 + $0xc8] sm:$0xff]
    %v154 = vld [vmem:[%s2 + $0xd0] sm:$0xff]
    %v155 = vld [vmem:[%s2 + $0xd8] sm:$0xff]
    %v156 = vld [vmem:[%s2 + $0xe0] sm:$0xff]
    %v157 = vld [vmem:[%s2 + $0xe8] sm:$0xff]
    %v158 = vld [vmem:[%s2 + $0xf0] sm:$0xff]
    %v159 = vld [vmem:[%s2 + $0xf8] sm:$0xff]
    %vm160 = vcmask 64512
    %v162 = vsel %vm160, %v128, 0
    %v165 = vsel %vm160, %v129, 0
    %v168 = vsel %vm160, %v130, 0
    %v171 = vsel %vm160, %v131, 0
    %v174 = vsel %vm160, %v132, 0
    %v177 = vsel %vm160, %v133, 0
    %v180 = vsel %vm160, %v134, 0
    %v183 = vsel %vm160, %v135, 0
    %v186 = vsel %vm160, %v136, 0
    %v189 = vsel %vm160, %v137, 0
    %v192 = vsel %vm160, %v138, 0
    %v195 = vsel %vm160, %v139, 0
    %v198 = vsel %vm160, %v140, 0
    %v201 = vsel %vm160, %v141, 0
    %v204 = vsel %vm160, %v142, 0
    %v207 = vsel %vm160, %v143, 0
    %v210 = vsel %vm160, %v144, 0
    %v213 = vsel %vm160, %v145, 0
    %v216 = vsel %vm160, %v146, 0
    %v219 = vsel %vm160, %v147, 0
    %v222 = vsel %vm160, %v148, 0
    %v225 = vsel %vm160, %v149, 0
    %v228 = vsel %vm160, %v150, 0
    %v231 = vsel %vm160, %v151, 0
    %v234 = vsel %vm160, %v152, 0
    %v237 = vsel %vm160, %v153, 0
    %v240 = vsel %vm160, %v154, 0
    %v243 = vsel %vm160, %v155, 0
    %v246 = vsel %vm160, %v156, 0
    %v249 = vsel %vm160, %v157, 0
    %v252 = vsel %vm160, %v158, 0
    %v255 = vsel %vm160, %v159, 0
    %257 = vmatprep.subr.mxu0 0.0
    %258 = vmatpush1.msra.mxu0 0.0
    %259 = vmatprep.subr.mxu0 0.0
    %260 = vmatpush1.msra.mxu0 0.0
    %261 = vmatprep.subr.mxu0 0.0
    %262 = vmatpush1.msra.mxu0 0.0
    %263 = vmatprep.subr.mxu0 0.0
    %264 = vmatpush1.msra.mxu0 0.0
    %265 = vmatprep.subr.mxu0 0.0
    %266 = vmatpush1.msra.mxu0 0.0
    %267 = vmatprep.subr.mxu0 0.0
    %268 = vmatpush1.msra.mxu0 0.0
    %269 = vmatprep.subr.mxu0 0.0
    %270 = vmatpush1.msra.mxu0 0.0
    %271 = vmatprep.subr.mxu0 0.0
    %272 = vmatpush1.msra.mxu0 0.0
    %273 = vmatprep.subr.mxu0 0.0
    %274 = vmatpush1.msra.mxu0 0.0
    %275 = vmatprep.subr.mxu0 0.0
    %276 = vmatpush1.msra.mxu0 0.0
    %277 = vmatprep.subr.mxu0 0.0
    %278 = vmatpush1.msra.mxu0 0.0
    %279 = vmatprep.subr.mxu0 0.0
    %280 = vmatpush1.msra.mxu0 0.0
    %281 = vmatprep.subr.mxu0 0.0
    %282 = vmatpush1.msra.mxu0 0.0
    %283 = vmatprep.subr.mxu0 0.0
    %284 = vmatpush1.msra.mxu0 0.0
    %285 = vmatprep.subr.mxu0 0.0
    %286 = vmatpush1.msra.mxu0 0.0
    %287 = vmatprep.subr.mxu0 0.0
    %288 = vmatpush1.msra.mxu0 %v125
    %289 = vmatprep.subr.mxu0 0.0
    %290 = vmatpush2.msra.mxu0 0.0
    %291 = vmatprep.subr.mxu0 0.0
    %292 = vmatpush2.msra.mxu0 0.0
    %293 = vmatprep.subr.mxu0 0.0
    %294 = vmatpush2.msra.mxu0 0.0
    %295 = vmatprep.subr.mxu0 0.0
    %296 = vmatpush2.msra.mxu0 0.0
    %297 = vmatprep.subr.mxu0 0.0
    %298 = vmatpush2.msra.mxu0 0.0
    %299 = vmatprep.subr.mxu0 0.0
    %300 = vmatpush2.msra.mxu0 0.0
    %301 = vmatprep.subr.mxu0 0.0
    %302 = vmatpush2.msra.mxu0 0.0
    %303 = vmatprep.subr.mxu0 0.0
    %304 = vmatpush2.msra.mxu0 0.0
    %305 = vmatprep.subr.mxu0 0.0
    %306 = vmatpush2.msra.mxu0 0.0
    %307 = vmatprep.subr.mxu0 0.0
    %308 = vmatpush2.msra.mxu0 0.0
    %309 = vmatprep.subr.mxu0 0.0
    %310 = vmatpush2.msra.mxu0 0.0
    %311 = vmatprep.subr.mxu0 0.0
    %312 = vmatpush2.msra.mxu0 0.0
    %313 = vmatprep.subr.mxu0 0.0
    %314 = vmatpush2.msra.mxu0 0.0
    %315 = vmatprep.subr.mxu0 0.0
    %316 = vmatpush2.msra.mxu0 0.0
    %317 = vmatprep.subr.mxu0 0.0
    %318 = vmatpush2.msra.mxu0 0.0
    %319 = vmatprep.subr.mxu0 0.0
    %320 = vmatpush2.msra.mxu0 0.0
    %321 = vmatprep.mubr.f32.mxu0 0.0
    %322 = vmatmul.mubr.f32.gmra.mxu0 %v162
    %v323 = vpop.f32.mrf.mxu0
    %v324 = vadd.f32 0.0, %v323
    %v325 = vpop.f32.mrf.mxu0
    %326 = vmatprep.mubr.f32.mxu0 0.0
    %327 = vmatmul.mubr.f32.gmra.mxu0 %v165
    %v328 = vpop.f32.mrf.mxu0
    %v329 = vadd.f32 0.0, %v328
    %v330 = vpop.f32.mrf.mxu0
    %331 = vmatprep.mubr.f32.mxu0 0.0
    %332 = vmatmul.mubr.f32.gmra.mxu0 %v168
    %v333 = vpop.f32.mrf.mxu0
    %v334 = vadd.f32 0.0, %v333
    %v335 = vpop.f32.mrf.mxu0
    %336 = vmatprep.mubr.f32.mxu0 0.0
    %337 = vmatmul.mubr.f32.gmra.mxu0 %v171
    %v338 = vpop.f32.mrf.mxu0
    %v339 = vadd.f32 0.0, %v338
    %v340 = vpop.f32.mrf.mxu0
    %341 = vmatprep.mubr.f32.mxu0 0.0
    %342 = vmatmul.mubr.f32.gmra.mxu0 %v174
    %v343 = vpop.f32.mrf.mxu0
    %v344 = vadd.f32 0.0, %v343
    %v345 = vpop.f32.mrf.mxu0
    %346 = vmatprep.mubr.f32.mxu0 0.0
    %347 = vmatmul.mubr.f32.gmra.mxu0 %v177
    %v348 = vpop.f32.mrf.mxu0
    %v349 = vadd.f32 0.0, %v348
    %v350 = vpop.f32.mrf.mxu0
    %351 = vmatprep.mubr.f32.mxu0 0.0
    %352 = vmatmul.mubr.f32.gmra.mxu0 %v180
    %v353 = vpop.f32.mrf.mxu0
    %v354 = vadd.f32 0.0, %v353
    %v355 = vpop.f32.mrf.mxu0
    %356 = vmatprep.mubr.f32.mxu0 0.0
    %357 = vmatmul.mubr.f32.gmra.mxu0 %v183
    %v358 = vpop.f32.mrf.mxu0
    %v359 = vadd.f32 0.0, %v358
    %v360 = vpop.f32.mrf.mxu0
    %361 = vmatprep.mubr.f32.mxu0 0.0
    %362 = vmatmul.mubr.f32.gmra.mxu0 %v186
    %v363 = vpop.f32.mrf.mxu0
    %v364 = vadd.f32 0.0, %v363
    %v365 = vpop.f32.mrf.mxu0
    %366 = vmatprep.mubr.f32.mxu0 0.0
    %367 = vmatmul.mubr.f32.gmra.mxu0 %v189
    %v368 = vpop.f32.mrf.mxu0
    %v369 = vadd.f32 0.0, %v368
    %v370 = vpop.f32.mrf.mxu0
    %371 = vmatprep.mubr.f32.mxu0 0.0
    %372 = vmatmul.mubr.f32.gmra.mxu0 %v192
    %v373 = vpop.f32.mrf.mxu0
    %v374 = vadd.f32 0.0, %v373
    %v375 = vpop.f32.mrf.mxu0
    %376 = vmatprep.mubr.f32.mxu0 0.0
    %377 = vmatmul.mubr.f32.gmra.mxu0 %v195
    %v378 = vpop.f32.mrf.mxu0
    %v379 = vadd.f32 0.0, %v378
    %v380 = vpop.f32.mrf.mxu0
    %381 = vmatprep.mubr.f32.mxu0 0.0
    %382 = vmatmul.mubr.f32.gmra.mxu0 %v198
    %v383 = vpop.f32.mrf.mxu0
    %v384 = vadd.f32 0.0, %v383
    %v385 = vpop.f32.mrf.mxu0
    %386 = vmatprep.mubr.f32.mxu0 0.0
    %387 = vmatmul.mubr.f32.gmra.mxu0 %v201
    %v388 = vpop.f32.mrf.mxu0
    %v389 = vadd.f32 0.0, %v388
    %v390 = vpop.f32.mrf.mxu0
    %391 = vmatprep.mubr.f32.mxu0 0.0
    %392 = vmatmul.mubr.f32.gmra.mxu0 %v204
    %v393 = vpop.f32.mrf.mxu0
    %v394 = vadd.f32 0.0, %v393
    %v395 = vpop.f32.mrf.mxu0
    %396 = vmatprep.mubr.f32.mxu0 0.0
    %397 = vmatmul.mubr.f32.gmra.mxu0 %v207
    %v398 = vpop.f32.mrf.mxu0
    %v399 = vadd.f32 0.0, %v398
    %v400 = vpop.f32.mrf.mxu0
    %401 = vmatprep.mubr.f32.mxu0 0.0
    %402 = vmatmul.mubr.f32.gmra.mxu0 %v210
    %v403 = vpop.f32.mrf.mxu0
    %v404 = vadd.f32 0.0, %v403
    %v405 = vpop.f32.mrf.mxu0
    %406 = vmatprep.mubr.f32.mxu0 0.0
    %407 = vmatmul.mubr.f32.gmra.mxu0 %v213
    %v408 = vpop.f32.mrf.mxu0
    %v409 = vadd.f32 0.0, %v408
    %v410 = vpop.f32.mrf.mxu0
    %411 = vmatprep.mubr.f32.mxu0 0.0
    %412 = vmatmul.mubr.f32.gmra.mxu0 %v216
    %v413 = vpop.f32.mrf.mxu0
    %v414 = vadd.f32 0.0, %v413
    %v415 = vpop.f32.mrf.mxu0
    %416 = vmatprep.mubr.f32.mxu0 0.0
    %417 = vmatmul.mubr.f32.gmra.mxu0 %v219
    %v418 = vpop.f32.mrf.mxu0
    %v419 = vadd.f32 0.0, %v418
    %v420 = vpop.f32.mrf.mxu0
    %421 = vmatprep.mubr.f32.mxu0 0.0
    %422 = vmatmul.mubr.f32.gmra.mxu0 %v222
    %v423 = vpop.f32.mrf.mxu0
    %v424 = vadd.f32 0.0, %v423
    %v425 = vpop.f32.mrf.mxu0
    %426 = vmatprep.mubr.f32.mxu0 0.0
    %427 = vmatmul.mubr.f32.gmra.mxu0 %v225
    %v428 = vpop.f32.mrf.mxu0
    %v429 = vadd.f32 0.0, %v428
    %v430 = vpop.f32.mrf.mxu0
    %431 = vmatprep.mubr.f32.mxu0 0.0
    %432 = vmatmul.mubr.f32.gmra.mxu0 %v228
    %v433 = vpop.f32.mrf.mxu0
    %v434 = vadd.f32 0.0, %v433
    %v435 = vpop.f32.mrf.mxu0
    %436 = vmatprep.mubr.f32.mxu0 0.0
    %437 = vmatmul.mubr.f32.gmra.mxu0 %v231
    %v438 = vpop.f32.mrf.mxu0
    %v439 = vadd.f32 0.0, %v438
    %v440 = vpop.f32.mrf.mxu0
    %441 = vmatprep.mubr.f32.mxu0 0.0
    %442 = vmatmul.mubr.f32.gmra.mxu0 %v234
    %v443 = vpop.f32.mrf.mxu0
    %v444 = vadd.f32 0.0, %v443
    %v445 = vpop.f32.mrf.mxu0
    %446 = vmatprep.mubr.f32.mxu0 0.0
    %447 = vmatmul.mubr.f32.gmra.mxu0 %v237
    %v448 = vpop.f32.mrf.mxu0
    %v449 = vadd.f32 0.0, %v448
    %v450 = vpop.f32.mrf.mxu0
    %451 = vmatprep.mubr.f32.mxu0 0.0
    %452 = vmatmul.mubr.f32.gmra.mxu0 %v240
    %v453 = vpop.f32.mrf.mxu0
    %v454 = vadd.f32 0.0, %v453
    %v455 = vpop.f32.mrf.mxu0
    %456 = vmatprep.mubr.f32.mxu0 0.0
    %457 = vmatmul.mubr.f32.gmra.mxu0 %v243
    %v458 = vpop.f32.mrf.mxu0
    %v459 = vadd.f32 0.0, %v458
    %v460 = vpop.f32.mrf.mxu0
    %461 = vmatprep.mubr.f32.mxu0 0.0
    %462 = vmatmul.mubr.f32.gmra.mxu0 %v246
    %v463 = vpop.f32.mrf.mxu0
    %v464 = vadd.f32 0.0, %v463
    %v465 = vpop.f32.mrf.mxu0
    %466 = vmatprep.mubr.f32.mxu0 0.0
    %467 = vmatmul.mubr.f32.gmra.mxu0 %v249
    %v468 = vpop.f32.mrf.mxu0
    %v469 = vadd.f32 0.0, %v468
    %v470 = vpop.f32.mrf.mxu0
    %471 = vmatprep.mubr.f32.mxu0 0.0
    %472 = vmatmul.mubr.f32.gmra.mxu0 %v252
    %v473 = vpop.f32.mrf.mxu0
    %v474 = vadd.f32 0.0, %v473
    %v475 = vpop.f32.mrf.mxu0
    %476 = vmatprep.mubr.f32.mxu0 0.0
    %477 = vmatmul.mubr.f32.gmra.mxu0 %v255
    %v478 = vpop.f32.mrf.mxu0
    %v479 = vadd.f32 0.0, %v478
    %v480 = vpop.f32.mrf.mxu0
    %481 = vdwg.mxu0
    %v482 = vld [vmem:[%s5] sm:$0x1]
    %v484 = vlaneseq
    %v485 = vshrl.u32 %v484, 7
    %v486 = vsub.s32 0, %v485
    %v487 = vrot.slane %v482, %v486
    %v489 = vmul.f32 %v324, %v487
    %v490 = vmul.f32 %v329, %v487
    %v491 = vmul.f32 %v334, %v487
    %v492 = vmul.f32 %v339, %v487
    %v493 = vmul.f32 %v344, %v487
    %v494 = vmul.f32 %v349, %v487
    %v495 = vmul.f32 %v354, %v487
    %v496 = vmul.f32 %v359, %v487
    %v497 = vmul.f32 %v364, %v487
    %v498 = vmul.f32 %v369, %v487
    %v499 = vmul.f32 %v374, %v487
    %v500 = vmul.f32 %v379, %v487
    %v501 = vmul.f32 %v384, %v487
    %v502 = vmul.f32 %v389, %v487
    %v503 = vmul.f32 %v394, %v487
    %v504 = vmul.f32 %v399, %v487
    %v505 = vmul.f32 %v404, %v487
    %v506 = vmul.f32 %v409, %v487
    %v507 = vmul.f32 %v414, %v487
    %v508 = vmul.f32 %v419, %v487
    %v509 = vmul.f32 %v424, %v487
    %v510 = vmul.f32 %v429, %v487
    %v511 = vmul.f32 %v434, %v487
    %v512 = vmul.f32 %v439, %v487
    %v513 = vmul.f32 %v444, %v487
    %v514 = vmul.f32 %v449, %v487
    %v515 = vmul.f32 %v454, %v487
    %v516 = vmul.f32 %v459, %v487
    %v517 = vmul.f32 %v464, %v487
    %v518 = vmul.f32 %v469, %v487
    %v519 = vmul.f32 %v474, %v487
    %v520 = vmul.f32 %v479, %v487
    %v521 = vsub.f32 %v24, %v489
    %v522 = vsub.f32 %v25, %v490
    %v523 = vsub.f32 %v26, %v491
    %v524 = vsub.f32 %v27, %v492
    %v525 = vsub.f32 %v28, %v493
    %v526 = vsub.f32 %v29, %v494
    %v527 = vsub.f32 %v30, %v495
    %v528 = vsub.f32 %v31, %v496
    %v529 = vsub.f32 %v32, %v497
    %v530 = vsub.f32 %v33, %v498
    %v531 = vsub.f32 %v34, %v499
    %v532 = vsub.f32 %v35, %v500
    %v533 = vsub.f32 %v36, %v501
    %v534 = vsub.f32 %v37, %v502
    %v535 = vsub.f32 %v38, %v503
    %v536 = vsub.f32 %v39, %v504
    %v537 = vsub.f32 %v40, %v505
    %v538 = vsub.f32 %v41, %v506
    %v539 = vsub.f32 %v42, %v507
    %v540 = vsub.f32 %v43, %v508
    %v541 = vsub.f32 %v44, %v509
    %v542 = vsub.f32 %v45, %v510
    %v543 = vsub.f32 %v46, %v511
    %v544 = vsub.f32 %v47, %v512
    %v545 = vsub.f32 %v48, %v513
    %v546 = vsub.f32 %v49, %v514
    %v547 = vsub.f32 %v50, %v515
    %v548 = vsub.f32 %v51, %v516
    %v549 = vsub.f32 %v52, %v517
    %v550 = vsub.f32 %v53, %v518
    %v551 = vsub.f32 %v54, %v519
    %v552 = vsub.f32 %v55, %v520
    %v553 = vmul.f32 %v521, %v521
    %v554 = vmul.f32 %v522, %v522
    %v555 = vmul.f32 %v523, %v523
    %v556 = vmul.f32 %v524, %v524
    %v557 = vmul.f32 %v525, %v525
    %v558 = vmul.f32 %v526, %v526
    %v559 = vmul.f32 %v527, %v527
    %v560 = vmul.f32 %v528, %v528
    %v561 = vmul.f32 %v529, %v529
    %v562 = vmul.f32 %v530, %v530
    %v563 = vmul.f32 %v531, %v531
    %v564 = vmul.f32 %v532, %v532
    %v565 = vmul.f32 %v533, %v533
    %v566 = vmul.f32 %v534, %v534
    %v567 = vmul.f32 %v535, %v535
    %v568 = vmul.f32 %v536, %v536
    %v569 = vmul.f32 %v537, %v537
    %v570 = vmul.f32 %v538, %v538
    %v571 = vmul.f32 %v539, %v539
    %v572 = vmul.f32 %v540, %v540
    %v573 = vmul.f32 %v541, %v541
    %v574 = vmul.f32 %v542, %v542
    %v575 = vmul.f32 %v543, %v543
    %v576 = vmul.f32 %v544, %v544
    %v577 = vmul.f32 %v545, %v545
    %v578 = vmul.f32 %v546, %v546
    %v579 = vmul.f32 %v547, %v547
    %v580 = vmul.f32 %v548, %v548
    %v581 = vmul.f32 %v549, %v549
    %v582 = vmul.f32 %v550, %v550
    %v583 = vmul.f32 %v551, %v551
    %v584 = vmul.f32 %v552, %v552
    %585 = vmatprep.subr.mxu0 0.0
    %586 = vmatpush1.msra.mxu0 %v568
    %587 = vmatprep.subr.mxu0 0.0
    %588 = vmatpush1.msra.mxu0 %v567
    %589 = vmatprep.subr.mxu0 0.0
    %590 = vmatpush1.msra.mxu0 %v566
    %591 = vmatprep.subr.mxu0 0.0
    %592 = vmatpush1.msra.mxu0 %v565
    %593 = vmatprep.subr.mxu0 0.0
    %594 = vmatpush1.msra.mxu0 %v564
    %595 = vmatprep.subr.mxu0 0.0
    %596 = vmatpush1.msra.mxu0 %v563
    %597 = vmatprep.subr.mxu0 0.0
    %598 = vmatpush1.msra.mxu0 %v562
    %599 = vmatprep.subr.mxu0 0.0
    %600 = vmatpush1.msra.mxu0 %v561
    %601 = vmatprep.subr.mxu0 0.0
    %602 = vmatpush1.msra.mxu0 %v560
    %603 = vmatprep.subr.mxu0 0.0
    %604 = vmatpush1.msra.mxu0 %v559
    %605 = vmatprep.subr.mxu0 0.0
    %606 = vmatpush1.msra.mxu0 %v558
    %607 = vmatprep.subr.mxu0 0.0
    %608 = vmatpush1.msra.mxu0 %v557
    %609 = vmatprep.subr.mxu0 0.0
    %610 = vmatpush1.msra.mxu0 %v556
    %611 = vmatprep.subr.mxu0 0.0
    %612 = vmatpush1.msra.mxu0 %v555
    %613 = vmatprep.subr.mxu0 0.0
    %614 = vmatpush1.msra.mxu0 %v554
    %615 = vmatprep.subr.mxu0 0.0
    %616 = vmatpush1.msra.mxu0 %v553
    %617 = vmatprep.subr.mxu0 0.0
    %618 = vmatpush2.msra.mxu0 %v584
    %619 = vmatprep.subr.mxu0 0.0
    %620 = vmatpush2.msra.mxu0 %v583
    %621 = vmatprep.subr.mxu0 0.0
    %622 = vmatpush2.msra.mxu0 %v582
    %623 = vmatprep.subr.mxu0 0.0
    %624 = vmatpush2.msra.mxu0 %v581
    %625 = vmatprep.subr.mxu0 0.0
    %626 = vmatpush2.msra.mxu0 %v580
    %627 = vmatprep.subr.mxu0 0.0
    %628 = vmatpush2.msra.mxu0 %v579
    %629 = vmatprep.subr.mxu0 0.0
    %630 = vmatpush2.msra.mxu0 %v578
    %631 = vmatprep.subr.mxu0 0.0
    %632 = vmatpush2.msra.mxu0 %v577
    %633 = vmatprep.subr.mxu0 0.0
    %634 = vmatpush2.msra.mxu0 %v576
    %635 = vmatprep.subr.mxu0 0.0
    %636 = vmatpush2.msra.mxu0 %v575
    %637 = vmatprep.subr.mxu0 0.0
    %638 = vmatpush2.msra.mxu0 %v574
    %639 = vmatprep.subr.mxu0 0.0
    %640 = vmatpush2.msra.mxu0 %v573
    %641 = vmatprep.subr.mxu0 0.0
    %642 = vmatpush2.msra.mxu0 %v572
    %643 = vmatprep.subr.mxu0 0.0
    %644 = vmatpush2.msra.mxu0 %v571
    %645 = vmatprep.subr.mxu0 0.0
    %646 = vmatpush2.msra.mxu0 %v570
    %647 = vmatprep.subr.mxu0 0.0
    %648 = vmatpush2.msra.mxu0 %v569
    %649 = vmatprep.mubr.f32.mxu0 %v57
    %650 = vmatmul.mubr.f32.gmra.mxu0 %v56
    %v651 = vpop.f32.mrf.mxu0
    %v652 = vadd.f32 1e-05, %v651
    %v653 = vpop.f32.mrf.mxu0
    %654 = vdwg.mxu0
    %v655 = vrsqrt.pop %v652
    %v656 = vld [vmem:[%s3] sm:$0x1]
    %v658 = vlaneseq
    %v659 = vshrl.u32 %v658, 7
    %v660 = vsub.s32 0, %v659
    %v661 = vrot.slane %v656, %v660
    %v663 = vmul.f32 %v655, %v661
    %664 = vmatprep.subr.mxu0 0.0
    %665 = vmatpush1.msra.mxu0 0.0
    %666 = vmatprep.subr.mxu0 0.0
    %667 = vmatpush1.msra.mxu0 0.0
    %668 = vmatprep.subr.mxu0 0.0
    %669 = vmatpush1.msra.mxu0 0.0
    %670 = vmatprep.subr.mxu0 0.0
    %671 = vmatpush1.msra.mxu0 0.0
    %672 = vmatprep.subr.mxu0 0.0
    %673 = vmatpush1.msra.mxu0 0.0
    %674 = vmatprep.subr.mxu0 0.0
    %675 = vmatpush1.msra.mxu0 0.0
    %676 = vmatprep.subr.mxu0 0.0
    %677 = vmatpush1.msra.mxu0 0.0
    %678 = vmatprep.subr.mxu0 0.0
    %679 = vmatpush1.msra.mxu0 0.0
    %680 = vmatprep.subr.mxu0 0.0
    %681 = vmatpush1.msra.mxu0 0.0
    %682 = vmatprep.subr.mxu0 0.0
    %683 = vmatpush1.msra.mxu0 0.0
    %684 = vmatprep.subr.mxu0 0.0
    %685 = vmatpush1.msra.mxu0 0.0
    %686 = vmatprep.subr.mxu0 0.0
    %687 = vmatpush1.msra.mxu0 0.0
    %688 = vmatprep.subr.mxu0 0.0
    %689 = vmatpush1.msra.mxu0 0.0
    %690 = vmatprep.subr.mxu0 0.0
    %691 = vmatpush1.msra.mxu0 0.0
    %692 = vmatprep.subr.mxu0 0.0
    %693 = vmatpush1.msra.mxu0 0.0
    %694 = vmatprep.subr.mxu0 0.0
    %695 = vmatpush1.msra.mxu0 %v663
    %696 = vmatprep.subr.mxu0 0.0
    %697 = vmatpush2.msra.mxu0 0.0
    %698 = vmatprep.subr.mxu0 0.0
    %699 = vmatpush2.msra.mxu0 0.0
    %700 = vmatprep.subr.mxu0 0.0
    %701 = vmatpush2.msra.mxu0 0.0
    %702 = vmatprep.subr.mxu0 0.0
    %703 = vmatpush2.msra.mxu0 0.0
    %704 = vmatprep.subr.mxu0 0.0
    %705 = vmatpush2.msra.mxu0 0.0
    %706 = vmatprep.subr.mxu0 0.0
    %707 = vmatpush2.msra.mxu0 0.0
    %708 = vmatprep.subr.mxu0 0.0
    %709 = vmatpush2.msra.mxu0 0.0
    %710 = vmatprep.subr.mxu0 0.0
    %711 = vmatpush2.msra.mxu0 0.0
    %712 = vmatprep.subr.mxu0 0.0
    %713 = vmatpush2.msra.mxu0 0.0
    %714 = vmatprep.subr.mxu0 0.0
    %715 = vmatpush2.msra.mxu0 0.0
    %716 = vmatprep.subr.mxu0 0.0
    %717 = vmatpush2.msra.mxu0 0.0
    %718 = vmatprep.subr.mxu0 0.0
    %719 = vmatpush2.msra.mxu0 0.0
    %720 = vmatprep.subr.mxu0 0.0
    %721 = vmatpush2.msra.mxu0 0.0
    %722 = vmatprep.subr.mxu0 0.0
    %723 = vmatpush2.msra.mxu0 0.0
    %724 = vmatprep.subr.mxu0 0.0
    %725 = vmatpush2.msra.mxu0 0.0
    %726 = vmatprep.subr.mxu0 0.0
    %727 = vmatpush2.msra.mxu0 0.0
    %728 = vmatprep.mubr.f32.mxu0 0.0
    %729 = vmatmul.mubr.f32.gmra.mxu0 %v162
    %v730 = vpop.f32.mrf.mxu0
    %v731 = vadd.f32 0.0, %v730
    %v732 = vpop.f32.mrf.mxu0
    %733 = vmatprep.mubr.f32.mxu0 0.0
    %734 = vmatmul.mubr.f32.gmra.mxu0 %v165
    %v735 = vpop.f32.mrf.mxu0
    %v736 = vadd.f32 0.0, %v735
    %v737 = vpop.f32.mrf.mxu0
    %738 = vmatprep.mubr.f32.mxu0 0.0
    %739 = vmatmul.mubr.f32.gmra.mxu0 %v168
    %v740 = vpop.f32.mrf.mxu0
    %v741 = vadd.f32 0.0, %v740
    %v742 = vpop.f32.mrf.mxu0
    %743 = vmatprep.mubr.f32.mxu0 0.0
    %744 = vmatmul.mubr.f32.gmra.mxu0 %v171
    %v745 = vpop.f32.mrf.mxu0
    %v746 = vadd.f32 0.0, %v745
    %v747 = vpop.f32.mrf.mxu0
    %748 = vmatprep.mubr.f32.mxu0 0.0
    %749 = vmatmul.mubr.f32.gmra.mxu0 %v174
    %v750 = vpop.f32.mrf.mxu0
    %v751 = vadd.f32 0.0, %v750
    %v752 = vpop.f32.mrf.mxu0
    %753 = vmatprep.mubr.f32.mxu0 0.0
    %754 = vmatmul.mubr.f32.gmra.mxu0 %v177
    %v755 = vpop.f32.mrf.mxu0
    %v756 = vadd.f32 0.0, %v755
    %v757 = vpop.f32.mrf.mxu0
    %758 = vmatprep.mubr.f32.mxu0 0.0
    %759 = vmatmul.mubr.f32.gmra.mxu0 %v180
    %v760 = vpop.f32.mrf.mxu0
    %v761 = vadd.f32 0.0, %v760
    %v762 = vpop.f32.mrf.mxu0
    %763 = vmatprep.mubr.f32.mxu0 0.0
    %764 = vmatmul.mubr.f32.gmra.mxu0 %v183
    %v765 = vpop.f32.mrf.mxu0
    %v766 = vadd.f32 0.0, %v765
    %v767 = vpop.f32.mrf.mxu0
    %768 = vmatprep.mubr.f32.mxu0 0.0
    %769 = vmatmul.mubr.f32.gmra.mxu0 %v186
    %v770 = vpop.f32.mrf.mxu0
    %v771 = vadd.f32 0.0, %v770
    %v772 = vpop.f32.mrf.mxu0
    %773 = vmatprep.mubr.f32.mxu0 0.0
    %774 = vmatmul.mubr.f32.gmra.mxu0 %v189
    %v775 = vpop.f32.mrf.mxu0
    %v776 = vadd.f32 0.0, %v775
    %v777 = vpop.f32.mrf.mxu0
    %778 = vmatprep.mubr.f32.mxu0 0.0
    %779 = vmatmul.mubr.f32.gmra.mxu0 %v192
    %v780 = vpop.f32.mrf.mxu0
    %v781 = vadd.f32 0.0, %v780
    %v782 = vpop.f32.mrf.mxu0
    %783 = vmatprep.mubr.f32.mxu0 0.0
    %784 = vmatmul.mubr.f32.gmra.mxu0 %v195
    %v785 = vpop.f32.mrf.mxu0
    %v786 = vadd.f32 0.0, %v785
    %v787 = vpop.f32.mrf.mxu0
    %788 = vmatprep.mubr.f32.mxu0 0.0
    %789 = vmatmul.mubr.f32.gmra.mxu0 %v198
    %v790 = vpop.f32.mrf.mxu0
    %v791 = vadd.f32 0.0, %v790
    %v792 = vpop.f32.mrf.mxu0
    %793 = vmatprep.mubr.f32.mxu0 0.0
    %794 = vmatmul.mubr.f32.gmra.mxu0 %v201
    %v795 = vpop.f32.mrf.mxu0
    %v796 = vadd.f32 0.0, %v795
    %v797 = vpop.f32.mrf.mxu0
    %798 = vmatprep.mubr.f32.mxu0 0.0
    %799 = vmatmul.mubr.f32.gmra.mxu0 %v204
    %v800 = vpop.f32.mrf.mxu0
    %v801 = vadd.f32 0.0, %v800
    %v802 = vpop.f32.mrf.mxu0
    %803 = vmatprep.mubr.f32.mxu0 0.0
    %804 = vmatmul.mubr.f32.gmra.mxu0 %v207
    %v805 = vpop.f32.mrf.mxu0
    %v806 = vadd.f32 0.0, %v805
    %v807 = vpop.f32.mrf.mxu0
    %808 = vmatprep.mubr.f32.mxu0 0.0
    %809 = vmatmul.mubr.f32.gmra.mxu0 %v210
    %v810 = vpop.f32.mrf.mxu0
    %v811 = vadd.f32 0.0, %v810
    %v812 = vpop.f32.mrf.mxu0
    %813 = vmatprep.mubr.f32.mxu0 0.0
    %814 = vmatmul.mubr.f32.gmra.mxu0 %v213
    %v815 = vpop.f32.mrf.mxu0
    %v816 = vadd.f32 0.0, %v815
    %v817 = vpop.f32.mrf.mxu0
    %818 = vmatprep.mubr.f32.mxu0 0.0
    %819 = vmatmul.mubr.f32.gmra.mxu0 %v216
    %v820 = vpop.f32.mrf.mxu0
    %v821 = vadd.f32 0.0, %v820
    %v822 = vpop.f32.mrf.mxu0
    %823 = vmatprep.mubr.f32.mxu0 0.0
    %824 = vmatmul.mubr.f32.gmra.mxu0 %v219
    %v825 = vpop.f32.mrf.mxu0
    %v826 = vadd.f32 0.0, %v825
    %v827 = vpop.f32.mrf.mxu0
    %828 = vmatprep.mubr.f32.mxu0 0.0
    %829 = vmatmul.mubr.f32.gmra.mxu0 %v222
    %v830 = vpop.f32.mrf.mxu0
    %v831 = vadd.f32 0.0, %v830
    %v832 = vpop.f32.mrf.mxu0
    %833 = vmatprep.mubr.f32.mxu0 0.0
    %834 = vmatmul.mubr.f32.gmra.mxu0 %v225
    %v835 = vpop.f32.mrf.mxu0
    %v836 = vadd.f32 0.0, %v835
    %v837 = vpop.f32.mrf.mxu0
    %838 = vmatprep.mubr.f32.mxu0 0.0
    %839 = vmatmul.mubr.f32.gmra.mxu0 %v228
    %v840 = vpop.f32.mrf.mxu0
    %v841 = vadd.f32 0.0, %v840
    %v842 = vpop.f32.mrf.mxu0
    %843 = vmatprep.mubr.f32.mxu0 0.0
    %844 = vmatmul.mubr.f32.gmra.mxu0 %v231
    %v845 = vpop.f32.mrf.mxu0
    %v846 = vadd.f32 0.0, %v845
    %v847 = vpop.f32.mrf.mxu0
    %848 = vmatprep.mubr.f32.mxu0 0.0
    %849 = vmatmul.mubr.f32.gmra.mxu0 %v234
    %v850 = vpop.f32.mrf.mxu0
    %v851 = vadd.f32 0.0, %v850
    %v852 = vpop.f32.mrf.mxu0
    %853 = vmatprep.mubr.f32.mxu0 0.0
    %854 = vmatmul.mubr.f32.gmra.mxu0 %v237
    %v855 = vpop.f32.mrf.mxu0
    %v856 = vadd.f32 0.0, %v855
    %v857 = vpop.f32.mrf.mxu0
    %858 = vmatprep.mubr.f32.mxu0 0.0
    %859 = vmatmul.mubr.f32.gmra.mxu0 %v240
    %v860 = vpop.f32.mrf.mxu0
    %v861 = vadd.f32 0.0, %v860
    %v862 = vpop.f32.mrf.mxu0
    %863 = vmatprep.mubr.f32.mxu0 0.0
    %864 = vmatmul.mubr.f32.gmra.mxu0 %v243
    %v865 = vpop.f32.mrf.mxu0
    %v866 = vadd.f32 0.0, %v865
    %v867 = vpop.f32.mrf.mxu0
    %868 = vmatprep.mubr.f32.mxu0 0.0
    %869 = vmatmul.mubr.f32.gmra.mxu0 %v246
    %v870 = vpop.f32.mrf.mxu0
    %v871 = vadd.f32 0.0, %v870
    %v872 = vpop.f32.mrf.mxu0
    %873 = vmatprep.mubr.f32.mxu0 0.0
    %874 = vmatmul.mubr.f32.gmra.mxu0 %v249
    %v875 = vpop.f32.mrf.mxu0
    %v876 = vadd.f32 0.0, %v875
    %v877 = vpop.f32.mrf.mxu0
    %878 = vmatprep.mubr.f32.mxu0 0.0
    %879 = vmatmul.mubr.f32.gmra.mxu0 %v252
    %v880 = vpop.f32.mrf.mxu0
    %v881 = vadd.f32 0.0, %v880
    %v882 = vpop.f32.mrf.mxu0
    %883 = vmatprep.mubr.f32.mxu0 0.0
    %884 = vmatmul.mubr.f32.gmra.mxu0 %v255
    %v885 = vpop.f32.mrf.mxu0
    %v886 = vadd.f32 0.0, %v885
    %v887 = vpop.f32.mrf.mxu0
    %888 = vdwg.mxu0
    %v889 = vmul.f32 %v521, %v731
    %v890 = vmul.f32 %v522, %v736
    %v891 = vmul.f32 %v523, %v741
    %v892 = vmul.f32 %v524, %v746
    %v893 = vmul.f32 %v525, %v751
    %v894 = vmul.f32 %v526, %v756
    %v895 = vmul.f32 %v527, %v761
    %v896 = vmul.f32 %v528, %v766
    %v897 = vmul.f32 %v529, %v771
    %v898 = vmul.f32 %v530, %v776
    %v899 = vmul.f32 %v531, %v781
    %v900 = vmul.f32 %v532, %v786
    %v901 = vmul.f32 %v533, %v791
    %v902 = vmul.f32 %v534, %v796
    %v903 = vmul.f32 %v535, %v801
    %v904 = vmul.f32 %v536, %v806
    %v905 = vmul.f32 %v537, %v811
    %v906 = vmul.f32 %v538, %v816
    %v907 = vmul.f32 %v539, %v821
    %v908 = vmul.f32 %v540, %v826
    %v909 = vmul.f32 %v541, %v831
    %v910 = vmul.f32 %v542, %v836
    %v911 = vmul.f32 %v543, %v841
    %v912 = vmul.f32 %v544, %v846
    %v913 = vmul.f32 %v545, %v851
    %v914 = vmul.f32 %v546, %v856
    %v915 = vmul.f32 %v547, %v861
    %v916 = vmul.f32 %v548, %v866
    %v917 = vmul.f32 %v549, %v871
    %v918 = vmul.f32 %v550, %v876
    %v919 = vmul.f32 %v551, %v881
    %v920 = vmul.f32 %v552, %v886
    %v921 = vld [vmem:[%s4] sm:$0x1]
    %v923 = vlaneseq
    %v924 = vshrl.u32 %v923, 7
    %v925 = vsub.s32 0, %v924
    %v926 = vrot.slane %v921, %v925
    %v928 = vadd.f32 %v889, %v926
    %v929 = vadd.f32 %v890, %v926
    %v930 = vadd.f32 %v891, %v926
    %v931 = vadd.f32 %v892, %v926
    %v932 = vadd.f32 %v893, %v926
    %v933 = vadd.f32 %v894, %v926
    %v934 = vadd.f32 %v895, %v926
    %v935 = vadd.f32 %v896, %v926
    %v936 = vadd.f32 %v897, %v926
    %v937 = vadd.f32 %v898, %v926
    %v938 = vadd.f32 %v899, %v926
    %v939 = vadd.f32 %v900, %v926
    %v940 = vadd.f32 %v901, %v926
    %v941 = vadd.f32 %v902, %v926
    %v942 = vadd.f32 %v903, %v926
    %v943 = vadd.f32 %v904, %v926
    %v944 = vadd.f32 %v905, %v926
    %v945 = vadd.f32 %v906, %v926
    %v946 = vadd.f32 %v907, %v926
    %v947 = vadd.f32 %v908, %v926
    %v948 = vadd.f32 %v909, %v926
    %v949 = vadd.f32 %v910, %v926
    %v950 = vadd.f32 %v911, %v926
    %v951 = vadd.f32 %v912, %v926
    %v952 = vadd.f32 %v913, %v926
    %v953 = vadd.f32 %v914, %v926
    %v954 = vadd.f32 %v915, %v926
    %v955 = vadd.f32 %v916, %v926
    %v956 = vadd.f32 %v917, %v926
    %v957 = vadd.f32 %v918, %v926
    %v958 = vadd.f32 %v919, %v926
    %v959 = vadd.f32 %v920, %v926
    %v960 = vpack.c.bf16 %v929, %v928
    %v961 = vpack.c.bf16 %v931, %v930
    %v962 = vpack.c.bf16 %v933, %v932
    %v963 = vpack.c.bf16 %v935, %v934
    %v964 = vpack.c.bf16 %v937, %v936
    %v965 = vpack.c.bf16 %v939, %v938
    %v966 = vpack.c.bf16 %v941, %v940
    %v967 = vpack.c.bf16 %v943, %v942
    %v968 = vpack.c.bf16 %v945, %v944
    %v969 = vpack.c.bf16 %v947, %v946
    %v970 = vpack.c.bf16 %v949, %v948
    %v971 = vpack.c.bf16 %v951, %v950
    %v972 = vpack.c.bf16 %v953, %v952
    %v973 = vpack.c.bf16 %v955, %v954
    %v974 = vpack.c.bf16 %v957, %v956
    %v975 = vpack.c.bf16 %v959, %v958
    %v992 = vunpack.c.l.b16 %v960
    %v993 = vunpack.c.h.b16 %v960
    %v994 = vunpack.c.l.b16 %v961
    %v995 = vunpack.c.h.b16 %v961
    %v996 = vunpack.c.l.b16 %v962
    %v997 = vunpack.c.h.b16 %v962
    %v998 = vunpack.c.l.b16 %v963
    %v999 = vunpack.c.h.b16 %v963
    %v1000 = vunpack.c.l.b16 %v964
    %v1001 = vunpack.c.h.b16 %v964
    %v1002 = vunpack.c.l.b16 %v965
    %v1003 = vunpack.c.h.b16 %v965
    %v1004 = vunpack.c.l.b16 %v966
    %v1005 = vunpack.c.h.b16 %v966
    %v1006 = vunpack.c.l.b16 %v967
    %v1007 = vunpack.c.h.b16 %v967
    %v1008 = vunpack.c.l.b16 %v968
    %v1009 = vunpack.c.h.b16 %v968
    %v1010 = vunpack.c.l.b16 %v969
    %v1011 = vunpack.c.h.b16 %v969
    %v1012 = vunpack.c.l.b16 %v970
    %v1013 = vunpack.c.h.b16 %v970
    %v1014 = vunpack.c.l.b16 %v971
    %v1015 = vunpack.c.h.b16 %v971
    %v1016 = vunpack.c.l.b16 %v972
    %v1017 = vunpack.c.h.b16 %v972
    %v1018 = vunpack.c.l.b16 %v973
    %v1019 = vunpack.c.h.b16 %v973
    %v1020 = vunpack.c.l.b16 %v974
    %v1021 = vunpack.c.h.b16 %v974
    %v1022 = vunpack.c.l.b16 %v975
    %v1023 = vunpack.c.h.b16 %v975
    %v1024 = vpack.c.b16 %v992, %v992
    %v1025 = vpack.c.b16 %v993, %v993
    %v1026 = vpack.c.b16 %v994, %v994
    %v1027 = vpack.c.b16 %v995, %v995
    %v1028 = vpack.c.b16 %v996, %v996
    %v1029 = vpack.c.b16 %v997, %v997
    %v1030 = vpack.c.b16 %v998, %v998
    %v1031 = vpack.c.b16 %v999, %v999
    %v1032 = vpack.c.b16 %v1000, %v1000
    %v1033 = vpack.c.b16 %v1001, %v1001
    %v1034 = vpack.c.b16 %v1002, %v1002
    %v1035 = vpack.c.b16 %v1003, %v1003
    %v1036 = vpack.c.b16 %v1004, %v1004
    %v1037 = vpack.c.b16 %v1005, %v1005
    %v1038 = vpack.c.b16 %v1006, %v1006
    %v1039 = vpack.c.b16 %v1007, %v1007
    %v1040 = vpack.c.b16 %v1008, %v1008
    %v1041 = vpack.c.b16 %v1009, %v1009
    %v1042 = vpack.c.b16 %v1010, %v1010
    %v1043 = vpack.c.b16 %v1011, %v1011
    %v1044 = vpack.c.b16 %v1012, %v1012
    %v1045 = vpack.c.b16 %v1013, %v1013
    %v1046 = vpack.c.b16 %v1014, %v1014
    %v1047 = vpack.c.b16 %v1015, %v1015
    %v1048 = vpack.c.b16 %v1016, %v1016
    %v1049 = vpack.c.b16 %v1017, %v1017
    %v1050 = vpack.c.b16 %v1018, %v1018
    %v1051 = vpack.c.b16 %v1019, %v1019
    %v1052 = vpack.c.b16 %v1020, %v1020
    %v1053 = vpack.c.b16 %v1021, %v1021
    %v1054 = vpack.c.b16 %v1022, %v1022
    %v1055 = vpack.c.b16 %v1023, %v1023
    %1088 = vst [vmem:[#allocation2] sm:$0xf] %v1024
    %1089 = vst [vmem:[#allocation2 + $0x4] sm:$0xf] %v1025
    %1090 = vst [vmem:[#allocation2 + $0x8] sm:$0xf] %v1026
    %1091 = vst [vmem:[#allocation2 + $0xc] sm:$0xf] %v1027
    %1092 = vst [vmem:[#allocation2 + $0x10] sm:$0xf] %v1028
    %1093 = vst [vmem:[#allocation2 + $0x14] sm:$0xf] %v1029
    %1094 = vst [vmem:[#allocation2 + $0x18] sm:$0xf] %v1030
    %1095 = vst [vmem:[#allocation2 + $0x1c] sm:$0xf] %v1031
    %1096 = vst [vmem:[#allocation2 + $0x20] sm:$0xf] %v1032
    %1097 = vst [vmem:[#allocation2 + $0x24] sm:$0xf] %v1033
    %1098 = vst [vmem:[#allocation2 + $0x28] sm:$0xf] %v1034
    %1099 = vst [vmem:[#allocation2 + $0x2c] sm:$0xf] %v1035
    %1100 = vst [vmem:[#allocation2 + $0x30] sm:$0xf] %v1036
    %1101 = vst [vmem:[#allocation2 + $0x34] sm:$0xf] %v1037
    %1102 = vst [vmem:[#allocation2 + $0x38] sm:$0xf] %v1038
    %1103 = vst [vmem:[#allocation2 + $0x3c] sm:$0xf] %v1039
    %1104 = vst [vmem:[#allocation2 + $0x40] sm:$0xf] %v1040
    %1105 = vst [vmem:[#allocation2 + $0x44] sm:$0xf] %v1041
    %1106 = vst [vmem:[#allocation2 + $0x48] sm:$0xf] %v1042
    %1107 = vst [vmem:[#allocation2 + $0x4c] sm:$0xf] %v1043
    %1108 = vst [vmem:[#allocation2 + $0x50] sm:$0xf] %v1044
    %1109 = vst [vmem:[#allocation2 + $0x54] sm:$0xf] %v1045
    %1110 = vst [vmem:[#allocation2 + $0x58] sm:$0xf] %v1046
    %1111 = vst [vmem:[#allocation2 + $0x5c] sm:$0xf] %v1047
    %1112 = vst [vmem:[#allocation2 + $0x60] sm:$0xf] %v1048
    %1113 = vst [vmem:[#allocation2 + $0x64] sm:$0xf] %v1049
    %1114 = vst [vmem:[#allocation2 + $0x68] sm:$0xf] %v1050
    %1115 = vst [vmem:[#allocation2 + $0x6c] sm:$0xf] %v1051
    %1116 = vst [vmem:[#allocation2 + $0x70] sm:$0xf] %v1052
    %1117 = vst [vmem:[#allocation2 + $0x74] sm:$0xf] %v1053
    %1118 = vst [vmem:[#allocation2 + $0x78] sm:$0xf] %v1054
    %1119 = vst [vmem:[#allocation2 + $0x7c] sm:$0xf] %v1055
    // Predicated region
    $region26: #{tpu_custom_call.1} parent=1 // pred_check
      _
    $region27: #{tpu_custom_call.1} parent=1 // pred_check_branch
      %1121 = sbr.rel (0) target = $region29
    $region28: #{tpu_custom_call.1} parent=1 // pred_region
      %s1123 = ssub.s32 2048, 2048
      %1124 = vsyncadd [#allocation3], %s1123
      %s1125 = sshll.u32 [#allocation2], 4
      %s1126 = int_to_ptr.vmem [resolvable:$true] %s1125
      %1131 = dma.vmem_to_hbm [thread:$0]  %s1126, 2048, %s6, [#allocation3], 64, 64, 4
    $region29: #{tpu_custom_call.1} parent=1 // pred_fallthru
      _
    // Predicated region
    $region30: #{tpu_custom_call.1} parent=1 // pred_check
      _
    $region31: #{tpu_custom_call.1} parent=1 // pred_check_branch
      %1133 = sbr.rel (0) target = $region33
    $region32: #{tpu_custom_call.1} parent=1 // pred_region
      %1134 = dma.done [#allocation3], 2048
    $region33: #{tpu_custom_call.1} parent=1 // pred_fallthru
      _
    %1135 = vsyncpa [#allocation3], 1

</llo_original>
